<compile_context>
chip_gen: v5e
topology: v5e:2x2
jax: 0.10.0
libtpu: 0.0.40
codegen_flags: <defaults>
</compile_context>

<pallas_src>
import functools

import jax
import jax.numpy as jnp
from jax.experimental import pallas as pl
from jax.experimental.pallas import tpu as pltpu


def _attnmap_kernel(x_ref, w1_ref, b1_ref, w2_ref, b2_ref, o_ref):
    # x_ref: (C, TL) tile — channels on sublanes, spatial positions on lanes.
    # w*_ref: (C, C) channel-mixing matrices (resident), b*_ref: (C, 1) f32.
    x = x_ref[...]
    in_dt = x_ref.dtype

    # Conv1d #1 (k=1): W1 @ x, f32 accumulation, bias broadcast along lanes.
    h = jnp.dot(w1_ref[...], x, preferred_element_type=jnp.float32) + b1_ref[...]

    # MemoryEfficientSwish: x * sigmoid(x), kept in f32 (v5e has no bf16 VPU/EUP).
    h = h * jax.nn.sigmoid(h)

    # Conv1d #2 (k=1): feed the MXU in the input dtype (native bf16 path on
    # v6e/v7x when inputs are bf16), accumulate in f32.
    y = jnp.dot(w2_ref[...], h.astype(in_dt),
                preferred_element_type=jnp.float32) + b2_ref[...]

    o_ref[...] = y.astype(o_ref.dtype)


@functools.partial(jax.jit, static_argnames=("tl_cap",))
def attn_map_forward(x_ncl, w1, b1, w2, b2, *, tl_cap=4096):
    """x_ncl: (N, C, L) like the PyTorch module.  w1/w2: (C_out, C_in, 1)."""
    N, C, L = x_ncl.shape
    assert C % 8 == 0, "channel count must be a multiple of 8 (sublane tiling)"

    dt = x_ncl.dtype
    # Conv1d kernel-size-1 weights -> plain (C_out, C_in) matrices in the I/O dtype.
    w1m = w1[:, :, 0].astype(dt)
    w2m = w2[:, :, 0].astype(dt)
    # Biases in f32, shaped (C, 1) to broadcast along the lane (spatial) axis.
    b1c = b1.reshape(C, 1).astype(jnp.float32)
    b2c = b2.reshape(C, 1).astype(jnp.float32)

    # Free reshape (contiguous): rows [n*C, (n+1)*C) of x2d are batch n's (C, L) slab.
    x2d = x_ncl.reshape(N * C, L)

    # Lane-dense spatial tile: multiple of 128 when possible, else the full L.
    if L < 128:
        tl = L
    else:
        tl = min(tl_cap, (L // 128) * 128)
    grid = (N, pl.cdiv(L, tl))

    y2d = pl.pallas_call(
        _attnmap_kernel,
        out_shape=jax.ShapeDtypeStruct((N * C, L), dt),
        grid_spec=pltpu.PrefetchScalarGridSpec(
            num_scalar_prefetch=0,
            grid=grid,
            in_specs=[
                pl.BlockSpec((C, tl), lambda n, j: (n, j)),   # x tile (streamed)
                pl.BlockSpec((C, C), lambda n, j: (0, 0)),    # W1 (resident)
                pl.BlockSpec((C, 1), lambda n, j: (0, 0)),    # b1 (resident)
                pl.BlockSpec((C, C), lambda n, j: (0, 0)),    # W2 (resident)
                pl.BlockSpec((C, 1), lambda n, j: (0, 0)),    # b2 (resident)
            ],
            out_specs=pl.BlockSpec((C, tl), lambda n, j: (n, j)),
        ),
        compiler_params=pltpu.CompilerParams(
            dimension_semantics=("parallel", "parallel"),
        ),
    )(x2d, w1m, b1c, w2m, b2c)

    return y2d.reshape(N, C, L)


def _reference(x_ncl, w1, b1, w2, b2):
    # Pure-JAX reference of the PyTorch forward (NCL, conv1d k=1).
    h = jnp.einsum("oc,ncl->nol", w1[:, :, 0], x_ncl) + b1[None, :, None]
    h = h * jax.nn.sigmoid(h)
    y = jnp.einsum("oc,ncl->nol", w2[:, :, 0], h) + b2[None, :, None]
    return y


if __name__ == "__main__":
    N, dim = 2, 32
    key = jax.random.PRNGKey(0)
    k1, k2, k3, k4, kx0, kx1 = jax.random.split(key, 6)

    # Deterministic parameter init (Conv1d weight shape: (out, in, kernel=1)).
    bound = 1.0 / (dim ** 0.5)
    w1 = jax.random.uniform(k1, (dim, dim, 1), minval=-bound, maxval=bound, dtype=jnp.float32)
    b1 = jax.random.uniform(k2, (dim,), minval=-bound, maxval=bound, dtype=jnp.float32)
    w2 = jax.random.uniform(k3, (dim, dim, 1), minval=-bound, maxval=bound, dtype=jnp.float32)
    b2 = jax.random.uniform(k4, (dim,), minval=-bound, maxval=bound, dtype=jnp.float32)

    # Two small spatial lengths: L=16 exercises the sub-128 full-dim block path,
    # L=160 exercises the lane-dense 128-wide tiles plus a ragged last tile.
    for xkey, L in ((kx0, 16), (kx1, 160)):
        x = jax.random.normal(xkey, (N, dim, L), dtype=jnp.float32)

        out = attn_map_forward(x, w1, b1, w2, b2)
        out = jax.block_until_ready(out)

        ref = _reference(x, w1, b1, w2, b2)
        assert out.shape == (N, dim, L)
        assert jnp.allclose(out, ref, atol=1e-5, rtol=1e-5), f"mismatch vs reference at L={L}"

    print("KERNEL_OK")
</pallas_src>

<mosaic_0001>
module attributes {stable_mosaic.version = 11 : i64} {
  func.func @_attnmap_kernel(%arg0: i32, %arg1: i32, %arg2: memref<32x16xf32, #tpu.memory_space<vmem>>, %arg3: memref<32x32xf32, #tpu.memory_space<vmem>>, %arg4: memref<32x1xf32, #tpu.memory_space<vmem>>, %arg5: memref<32x32xf32, #tpu.memory_space<vmem>>, %arg6: memref<32x1xf32, #tpu.memory_space<vmem>>, %arg7: memref<32x16xf32, #tpu.memory_space<vmem>>) attributes {dimension_semantics = [#tpu.dimension_semantics<parallel>, #tpu.dimension_semantics<parallel>], iteration_bounds = array<i64: 2, 1>, scalar_prefetch = 0 : i64, scratch_operands = 0 : i64, tpu.core_type = #tpu.core_type<tc>, window_params = [{transform_indices = @transform_0, window_bounds = array<i64: 32, 16>}, {pipeline_mode = #tpu.pipeline_mode<synchronous>, transform_indices = @transform_1, window_bounds = array<i64: 32, 32>}, {pipeline_mode = #tpu.pipeline_mode<synchronous>, transform_indices = @transform_2, window_bounds = array<i64: 32, 1>}, {pipeline_mode = #tpu.pipeline_mode<synchronous>, transform_indices = @transform_3, window_bounds = array<i64: 32, 32>}, {pipeline_mode = #tpu.pipeline_mode<synchronous>, transform_indices = @transform_4, window_bounds = array<i64: 32, 1>}, {transform_indices = @transform_5, window_bounds = array<i64: 32, 16>}]} {
    %c0 = arith.constant 0 : index
    %c0_0 = arith.constant 0 : index
    %0 = vector.load %arg2[%c0, %c0_0] : memref<32x16xf32, #tpu.memory_space<vmem>>, vector<32x16xf32>
    %c0_1 = arith.constant 0 : index
    %c0_2 = arith.constant 0 : index
    %1 = vector.load %arg3[%c0_1, %c0_2] : memref<32x32xf32, #tpu.memory_space<vmem>>, vector<32x32xf32>
    %cst = arith.constant dense<0.000000e+00> : vector<32x16xf32>
    %2 = tpu.matmul %1, %0, %cst {dimension_numbers = #tpu.dot_dimension_numbers<[1], [0], [0], [1], [0, 0, 1, 1], [], []>} : vector<32x32xf32>, vector<32x16xf32>, vector<32x16xf32> -> vector<32x16xf32>
    %c0_3 = arith.constant 0 : index
    %c0_4 = arith.constant 0 : index
    %3 = vector.load %arg4[%c0_3, %c0_4] : memref<32x1xf32, #tpu.memory_space<vmem>>, vector<32x1xf32>
    %4 = vector.broadcast %3 : vector<32x1xf32> to vector<32x16xf32>
    %5 = arith.addf %2, %4 : vector<32x16xf32>
    %6 = arith.negf %5 : vector<32x16xf32>
    %7 = math.exp %6 : vector<32x16xf32>
    %cst_5 = arith.constant 1.000000e+00 : f32
    %8 = vector.broadcast %cst_5 : f32 to vector<32x16xf32>
    %9 = arith.addf %8, %7 : vector<32x16xf32>
    %10 = arith.divf %8, %9 : vector<32x16xf32>
    %11 = arith.mulf %5, %10 : vector<32x16xf32>
    %c0_6 = arith.constant 0 : index
    %c0_7 = arith.constant 0 : index
    %12 = vector.load %arg5[%c0_6, %c0_7] : memref<32x32xf32, #tpu.memory_space<vmem>>, vector<32x32xf32>
    %cst_8 = arith.constant dense<0.000000e+00> : vector<32x16xf32>
    %13 = tpu.matmul %12, %11, %cst_8 {dimension_numbers = #tpu.dot_dimension_numbers<[1], [0], [0], [1], [0, 0, 1, 1], [], []>} : vector<32x32xf32>, vector<32x16xf32>, vector<32x16xf32> -> vector<32x16xf32>
    %c0_9 = arith.constant 0 : index
    %c0_10 = arith.constant 0 : index
    %14 = vector.load %arg6[%c0_9, %c0_10] : memref<32x1xf32, #tpu.memory_space<vmem>>, vector<32x1xf32>
    %15 = vector.broadcast %14 : vector<32x1xf32> to vector<32x16xf32>
    %16 = arith.addf %13, %15 : vector<32x16xf32>
    %c0_11 = arith.constant 0 : index
    %c0_12 = arith.constant 0 : index
    %17 = vector.load %arg7[%c0_11, %c0_12] : memref<32x16xf32, #tpu.memory_space<vmem>>, vector<32x16xf32>
    tpu.vector_store %arg7[%c0_11, %c0_12], %16 {strides = array<i32>} : memref<32x16xf32, #tpu.memory_space<vmem>>, vector<32x16xf32>,
    return
  }
  func.func @transform_0(%arg0: i32, %arg1: i32) -> (i32, i32) {
    %c0_i32 = arith.constant 0 : i32
    return %arg0, %arg1 : i32, i32
  }
  func.func @transform_1(%arg0: i32, %arg1: i32) -> (i32, i32) {
    %c0_i32 = arith.constant 0 : i32
    %c0_i32_0 = arith.constant 0 : i32
    %c0_i32_1 = arith.constant 0 : i32
    return %c0_i32, %c0_i32_0 : i32, i32
  }
  func.func @transform_2(%arg0: i32, %arg1: i32) -> (i32, i32) {
    %c0_i32 = arith.constant 0 : i32
    %c0_i32_0 = arith.constant 0 : i32
    %c0_i32_1 = arith.constant 0 : i32
    return %c0_i32, %c0_i32_0 : i32, i32
  }
  func.func @transform_3(%arg0: i32, %arg1: i32) -> (i32, i32) {
    %c0_i32 = arith.constant 0 : i32
    %c0_i32_0 = arith.constant 0 : i32
    %c0_i32_1 = arith.constant 0 : i32
    return %c0_i32, %c0_i32_0 : i32, i32
  }
  func.func @transform_4(%arg0: i32, %arg1: i32) -> (i32, i32) {
    %c0_i32 = arith.constant 0 : i32
    %c0_i32_0 = arith.constant 0 : i32
    %c0_i32_1 = arith.constant 0 : i32
    return %c0_i32, %c0_i32_0 : i32, i32
  }
  func.func @transform_5(%arg0: i32, %arg1: i32) -> (i32, i32) {
    %c0_i32 = arith.constant 0 : i32
    return %arg0, %arg1 : i32, i32
  }
}

</mosaic_0001>

<llo_original>
// kernel: attn_map_forward.1
$region0: #{attn_map_forward.1}
  #allocation0 [shape = 'u32[]', space=smem, size = 0x4, offset = 0x4, fixed_abs, tag = 'smem constant byte address 0x4 - core index']
  #allocation1 [shape = 'u32[72,128]{1,0:T(1,128)}', space=vmem, size = 0x9000, scoped, tag = 'internal scratch']
  %s0 = inlined_call_operand.vmem [shape: f32[64,16], index: 0, kind: input, shape index: {}]
  %s1 = inlined_call_operand.vmem [shape: f32[32,32], index: 1, kind: input, shape index: {}]
  %s2 = inlined_call_operand.vmem [shape: f32[32,1], index: 2, kind: input, shape index: {}]
  %s3 = inlined_call_operand.vmem [shape: f32[32,32], index: 3, kind: input, shape index: {}]
  %s4 = inlined_call_operand.vmem [shape: f32[32,1], index: 4, kind: input, shape index: {}]
  %s5 = inlined_call_operand.vmem [shape: f32[64,16], index: 5, kind: output, shape index: {}]
  %s6 = sld [smem:[#allocation0]]
  $region53: #{attn_map_forward.1} parent=0
    _
  %s8 = ssub.s32 1, %s6
  %s9 = scalar_select 0, %s8, %s6
  loop: start=0, step=1, limit=4
  $region2: #{attn_map_forward.1} parent=0 // loop_pre_header
    _
  $region3: #{attn_map_forward.1} parent=0 // loop_header
    %s11 = sphi 0, %s15
    %p12 = scmp.ge.s32.totalorder %s11, 4
    %s18 = sphi 0, %s30
    %s19 = sphi 0, %s26
    %s20 = sphi 0, %s18
    %s21 = sphi 0, %s19
    %s22 = sphi 0, %s20
    %s23 = sphi 0, %s21
    %s35 = sphi 0, %s37
    %s38 = sphi 0, %s35
    %s39 = sphi 0, %s38
    %s55 = sphi 0, %s39
    %s59 = sphi 0, %s59
    %s61 = sphi 0, %s59
    %s62 = sphi 0, %s61
    %s76 = sphi 0, %s62
    %s80 = sphi 0, %s80
    %s82 = sphi 0, %s80
    %s83 = sphi 0, %s82
    %s97 = sphi 0, %s83
    %s101 = sphi 0, %s101
    %s103 = sphi 0, %s101
    %s104 = sphi 0, %s103
    %s118 = sphi 0, %s104
    %s122 = sphi 0, %s122
    %s124 = sphi 0, %s122
    %s125 = sphi 0, %s124
    %s139 = sphi 0, %s125
    %s147 = sphi 0, %s149
    %s150 = sphi 0, %s147
    %s151 = sphi 0, %s150
    %s167 = sphi 0, %s151
  $region4: #{attn_map_forward.1} parent=0 // loop_header_branch
    %14 = sbr.rel (%p12) target = $region8
  $region5: #{attn_map_forward.1} parent=0 // loop_body
    %s16 = ssub.s32 %s11, 1
    %s17 = ssub.s32 %s11, 2
    %s24 = sadd.s32 1, %s19
    %p25 = scmp.ge.s32.totalorder %s24, 1
    %s26 = scalar_select %p25, 0, %s24
    %s27 = sadd.s32 1, %s18
    %s28 = scalar_select %p25, %s27, %s18
    %p29 = scmp.ge.s32.totalorder %s28, 2
    %s30 = scalar_select %p29, 0, %s28
    %s31 = ssub.s32 %s18, %s30
    %s32 = ssub.s32 %s19, %s26
    %s33 = sor.u32 %s31, %s32
    %p34 = scmp.eq.s32.totalorder %s33, 0
    %s36 = sadd.s32 %s35, 1
    %s37 = scalar_select %p34, %s35, %s36
    %p40 = pneg %p34
    %p41 = scmp.eq.s32.totalorder %s11, 1
    %p42 = por %p40, %p41
    %p43 = scmp.ne.s32.totalorder %s35, %s38
    %p44 = scmp.eq.s32.totalorder %s11, 0
    %p45 = por %p43, %p44
    %p46 = scmp.ne.s32.totalorder %s35, %s38
    %p47 = scmp.eq.s32.totalorder %s16, 1
    %p48 = por %p46, %p47
    %p49 = scmp.ne.s32.totalorder %s38, %s39
    %p50 = scmp.eq.s32.totalorder %s16, 0
    %p51 = por %p49, %p50
    %p52 = scmp.ne.s32.totalorder %s38, %s39
    %p53 = scmp.eq.s32.totalorder %s17, 1
    %p54 = por %p52, %p53
    %p56 = scmp.ne.s32.totalorder %s39, %s55
    %p57 = scmp.eq.s32.totalorder %s17, 0
    %p58 = por %p56, %p57
    %s60 = sadd.s32 %s59, 1
    %p63 = scmp.eq.s32.totalorder %s11, 1
    %p64 = scmp.ne.s32.totalorder %s59, %s61
    %p65 = scmp.eq.s32.totalorder %s11, 0
    %p66 = por %p64, %p65
    %p67 = scmp.ne.s32.totalorder %s59, %s61
    %p68 = scmp.eq.s32.totalorder %s16, 1
    %p69 = por %p67, %p68
    %p70 = scmp.ne.s32.totalorder %s61, %s62
    %p71 = scmp.eq.s32.totalorder %s16, 0
    %p72 = por %p70, %p71
    %p73 = scmp.ne.s32.totalorder %s61, %s62
    %p74 = scmp.eq.s32.totalorder %s17, 1
    %p75 = por %p73, %p74
    %p77 = scmp.ne.s32.totalorder %s62, %s76
    %p78 = scmp.eq.s32.totalorder %s17, 0
    %p79 = por %p77, %p78
    %s81 = sadd.s32 %s80, 1
    %p84 = scmp.eq.s32.totalorder %s11, 1
    %p85 = scmp.ne.s32.totalorder %s80, %s82
    %p86 = scmp.eq.s32.totalorder %s11, 0
    %p87 = por %p85, %p86
    %p88 = scmp.ne.s32.totalorder %s80, %s82
    %p89 = scmp.eq.s32.totalorder %s16, 1
    %p90 = por %p88, %p89
    %p91 = scmp.ne.s32.totalorder %s82, %s83
    %p92 = scmp.eq.s32.totalorder %s16, 0
    %p93 = por %p91, %p92
    %p94 = scmp.ne.s32.totalorder %s82, %s83
    %p95 = scmp.eq.s32.totalorder %s17, 1
    %p96 = por %p94, %p95
    %p98 = scmp.ne.s32.totalorder %s83, %s97
    %p99 = scmp.eq.s32.totalorder %s17, 0
    %p100 = por %p98, %p99
    %s102 = sadd.s32 %s101, 1
    %p105 = scmp.eq.s32.totalorder %s11, 1
    %p106 = scmp.ne.s32.totalorder %s101, %s103
    %p107 = scmp.eq.s32.totalorder %s11, 0
    %p108 = por %p106, %p107
    %p109 = scmp.ne.s32.totalorder %s101, %s103
    %p110 = scmp.eq.s32.totalorder %s16, 1
    %p111 = por %p109, %p110
    %p112 = scmp.ne.s32.totalorder %s103, %s104
    %p113 = scmp.eq.s32.totalorder %s16, 0
    %p114 = por %p112, %p113
    %p115 = scmp.ne.s32.totalorder %s103, %s104
    %p116 = scmp.eq.s32.totalorder %s17, 1
    %p117 = por %p115, %p116
    %p119 = scmp.ne.s32.totalorder %s104, %s118
    %p120 = scmp.eq.s32.totalorder %s17, 0
    %p121 = por %p119, %p120
    %s123 = sadd.s32 %s122, 1
    %p126 = scmp.eq.s32.totalorder %s11, 1
    %p127 = scmp.ne.s32.totalorder %s122, %s124
    %p128 = scmp.eq.s32.totalorder %s11, 0
    %p129 = por %p127, %p128
    %p130 = scmp.ne.s32.totalorder %s122, %s124
    %p131 = scmp.eq.s32.totalorder %s16, 1
    %p132 = por %p130, %p131
    %p133 = scmp.ne.s32.totalorder %s124, %s125
    %p134 = scmp.eq.s32.totalorder %s16, 0
    %p135 = por %p133, %p134
    %p136 = scmp.ne.s32.totalorder %s124, %s125
    %p137 = scmp.eq.s32.totalorder %s17, 1
    %p138 = por %p136, %p137
    %p140 = scmp.ne.s32.totalorder %s125, %s139
    %p141 = scmp.eq.s32.totalorder %s17, 0
    %p142 = por %p140, %p141
    %s143 = ssub.s32 %s18, %s30
    %s144 = ssub.s32 %s19, %s26
    %s145 = sor.u32 %s143, %s144
    %p146 = scmp.eq.s32.totalorder %s145, 0
    %s148 = sadd.s32 %s147, 1
    %s149 = scalar_select %p146, %s147, %s148
    %p152 = pneg %p146
    %p153 = scmp.eq.s32.totalorder %s11, 1
    %p154 = por %p152, %p153
    %p155 = scmp.ne.s32.totalorder %s147, %s150
    %p156 = scmp.eq.s32.totalorder %s11, 0
    %p157 = por %p155, %p156
    %p158 = scmp.ne.s32.totalorder %s147, %s150
    %p159 = scmp.eq.s32.totalorder %s16, 1
    %p160 = por %p158, %p159
    %p161 = scmp.ne.s32.totalorder %s150, %s151
    %p162 = scmp.eq.s32.totalorder %s16, 0
    %p163 = por %p161, %p162
    %p164 = scmp.ne.s32.totalorder %s150, %s151
    %p165 = scmp.eq.s32.totalorder %s17, 1
    %p166 = por %p164, %p165
    %p168 = scmp.ne.s32.totalorder %s151, %s167
    %p169 = scmp.eq.s32.totalorder %s17, 0
    %p170 = por %p168, %p169
    %p171 = scmp.le.s32.totalorder 1, %s11
    %p172 = scmp.lt.s32.totalorder %s11, 3
    %p173 = pnand %p171, %p172
    %p174 = pneg %p173
    // Predicated region
    $region9: #{attn_map_forward.1} parent=5 // pred_check
      _
    $region10: #{attn_map_forward.1} parent=5 // pred_check_branch
      %176 = sbr.rel (%p173) target = $region12
    $region11: #{attn_map_forward.1} parent=5 // pred_region
      %s177 = ssub.s32 %s11, 1
      // Predicated region
      $region13: #{attn_map_forward.1} parent=11 // pred_check
        %p178 = pneg %p72
      $region14: #{attn_map_forward.1} parent=11 // pred_check_branch
        %180 = sbr.rel (%p178) target = $region16
      $region15: #{attn_map_forward.1} parent=11 // pred_region
        _
      $region16: #{attn_map_forward.1} parent=11 // pred_fallthru
        _
      // Predicated region
      $region17: #{attn_map_forward.1} parent=11 // pred_check
        %p181 = pneg %p93
      $region18: #{attn_map_forward.1} parent=11 // pred_check_branch
        %183 = sbr.rel (%p181) target = $region20
      $region19: #{attn_map_forward.1} parent=11 // pred_region
        _
      $region20: #{attn_map_forward.1} parent=11 // pred_fallthru
        _
      // Predicated region
      $region21: #{attn_map_forward.1} parent=11 // pred_check
        %p184 = pneg %p114
      $region22: #{attn_map_forward.1} parent=11 // pred_check_branch
        %186 = sbr.rel (%p184) target = $region24
      $region23: #{attn_map_forward.1} parent=11 // pred_region
        _
      $region24: #{attn_map_forward.1} parent=11 // pred_fallthru
        _
      // Predicated region
      $region25: #{attn_map_forward.1} parent=11 // pred_check
        %p187 = pneg %p135
      $region26: #{attn_map_forward.1} parent=11 // pred_check_branch
        %189 = sbr.rel (%p187) target = $region28
      $region27: #{attn_map_forward.1} parent=11 // pred_region
        _
      $region28: #{attn_map_forward.1} parent=11 // pred_fallthru
        _
    $region12: #{attn_map_forward.1} parent=5 // pred_fallthru
      _
    %p190 = scmp.lt.s32.totalorder %s11, 2
    // Predicated region
    $region29: #{attn_map_forward.1} parent=5 // pred_check
      %p191 = pneg %p190
    $region30: #{attn_map_forward.1} parent=5 // pred_check_branch
      %193 = sbr.rel (%p191) target = $region32
    $region31: #{attn_map_forward.1} parent=5 // pred_region
      // Predicated region
      $region33: #{attn_map_forward.1} parent=31 // pred_check
        %p194 = pneg %p45
      $region34: #{attn_map_forward.1} parent=31 // pred_check_branch
        %196 = sbr.rel (%p194) target = $region36
      $region35: #{attn_map_forward.1} parent=31 // pred_region
        %s197 = smul.u32 4, %s18
        %p198 = scmp.lt.s32.totalorder %s197, 7
        %s199 = scalar_select %p198, %s197, 7
        %p200 = scmp.lt.s32.totalorder %s19, 0
        %s201 = scalar_select %p200, %s19, 0
        %s202 = sadd.s32 %s201, %s199
        %s203 = smul.addr %s202, 8
        %s204 = scalar_lea.vmem %s0, %s203
        %s205 = smul.u32 4, %s18
      $region36: #{attn_map_forward.1} parent=31 // pred_fallthru
        _
    $region32: #{attn_map_forward.1} parent=5 // pred_fallthru
      _
    %p206 = scmp.le.s32.totalorder 1, %s11
    %p207 = scmp.lt.s32.totalorder %s11, 3
    %p208 = pnand %p206, %p207
    %p209 = pneg %p208
    // Predicated region
    $region37: #{attn_map_forward.1} parent=5 // pred_check
      _
    $region38: #{attn_map_forward.1} parent=5 // pred_check_branch
      %211 = sbr.rel (%p208) target = $region40
    $region39: #{attn_map_forward.1} parent=5 // pred_region
      %s212 = ssub.s32 %s11, 1
      %s213 = smul.u32 4, %s20
      %p214 = scmp.lt.s32.totalorder %s213, 7
      %s215 = scalar_select %p214, %s213, 7
      %p216 = scmp.lt.s32.totalorder %s21, 0
      %s217 = scalar_select %p216, %s21, 0
      %s218 = sadd.s32 %s217, %s215
      %s219 = smul.addr %s218, 8
      %s220 = scalar_lea.vmem %s0, %s219
      %p221 = pneg %p51
      %p222 = pneg %p48
      %p223 = pneg %p72
      %p224 = pneg %p69
      %p225 = pneg %p93
      %p226 = pneg %p90
      %p227 = pneg %p114
      %p228 = pneg %p111
      %p229 = pneg %p135
      %p230 = pneg %p132
      %p231 = pneg %p163
      %p232 = pneg %p160
      %s233 = smul.u32 4, %s20
      %p234 = scmp.lt.s32.totalorder %s233, 7
      %s235 = scalar_select %p234, %s233, 7
      %p236 = scmp.lt.s32.totalorder %s21, 0
      %s237 = scalar_select %p236, %s21, 0
      %s238 = sadd.s32 %s237, %s235
      %s239 = smul.addr %s238, 8
      %s240 = scalar_lea.vmem %s5, %s239
      %s241 = smul.u32 4, %s20
      %p242 = scmp.lt.s32.totalorder %s241, 7
      %s243 = scalar_select %p242, %s241, 7
      %p244 = scmp.lt.s32.totalorder %s21, 0
      %s245 = scalar_select %p244, %s21, 0
      %s246 = sadd.s32 %s245, %s243
      %s247 = smul.addr %s246, 8
      %s248 = scalar_lea.vmem %s0, %s247
      %s249 = smul.u32 4, %s20
      %s250 = smul.u32 4, %s20
      %p251 = scmp.lt.s32.totalorder %s250, 7
      %s252 = scalar_select %p251, %s250, 7
      %p253 = scmp.lt.s32.totalorder %s21, 0
      %s254 = scalar_select %p253, %s21, 0
      %s255 = sadd.s32 %s254, %s252
      %s256 = smul.addr %s255, 8
      %s257 = scalar_lea.vmem %s5, %s256
      %s258 = smul.u32 4, %s20
      %v259 = vld [vmem:[%s248] sm:$0xff]
      %v260 = vld [vmem:[%s248 + $0x8] sm:$0xff]
      %v261 = vld [vmem:[%s248 + $0x10] sm:$0xff]
      %v262 = vld [vmem:[%s248 + $0x18] sm:$0xff]
      %v263 = vld [vmem:[%s1] sm:$0xff]
      %v264 = vld [vmem:[%s1 + $0x8] sm:$0xff]
      %v265 = vld [vmem:[%s1 + $0x10] sm:$0xff]
      %v266 = vld [vmem:[%s1 + $0x18] sm:$0xff]
      %v267 = vld [vmem:[%s2] sm:$0xff]
      %v268 = vld [vmem:[%s2 + $0x8] sm:$0xff]
      %v269 = vld [vmem:[%s2 + $0x10] sm:$0xff]
      %v270 = vld [vmem:[%s2 + $0x18] sm:$0xff]
      %272 = vset.pattern.permute.xlu0 0
      %273 = vperm.xlu0 %272, %v267
      %v274 = vpop.permute.xlu0 %273
      %277 = vset.pattern.permute.xlu0 0
      %278 = vperm.xlu0 %277, %v268
      %v279 = vpop.permute.xlu0 %278
      %282 = vset.pattern.permute.xlu0 0
      %283 = vperm.xlu0 %282, %v269
      %v284 = vpop.permute.xlu0 %283
      %287 = vset.pattern.permute.xlu0 0
      %288 = vperm.xlu0 %287, %v270
      %v289 = vpop.permute.xlu0 %288
      %vm291 = vcmask 261120
      %v293 = vsel %vm291, %v263, 0
      %v296 = vsel %vm291, %v264, 0
      %v299 = vsel %vm291, %v265, 0
      %v302 = vsel %vm291, %v266, 0
      %304 = vmatpush.msra.mxu0 0.0
      %305 = vmatpush.msra.mxu0 0.0
      %306 = vmatpush.msra.mxu0 0.0
      %307 = vmatpush.msra.mxu0 0.0
      %308 = vmatpush.msra.mxu0 0.0
      %309 = vmatpush.msra.mxu0 0.0
      %310 = vmatpush.msra.mxu0 0.0
      %311 = vmatpush.msra.mxu0 0.0
      %312 = vmatpush.msra.mxu0 0.0
      %313 = vmatpush.msra.mxu0 0.0
      %314 = vmatpush.msra.mxu0 0.0
      %315 = vmatpush.msra.mxu0 0.0
      %316 = vmatpush.msra.mxu0 %v262
      %317 = vmatpush.msra.mxu0 %v261
      %318 = vmatpush.msra.mxu0 %v260
      %319 = vmatpush.msra.mxu0 %v259
      %320 = vmatmul.f32.gmra.mxu0 %v293
      %v321 = vpop.f32.mrf.mxu0
      %v322 = vadd.f32 %v274, %v321
      %323 = vmatmul.f32.gmra.mxu0 %v296
      %v324 = vpop.f32.mrf.mxu0
      %v325 = vadd.f32 %v279, %v324
      %326 = vmatmul.f32.gmra.mxu0 %v299
      %v327 = vpop.f32.mrf.mxu0
      %v328 = vadd.f32 %v284, %v327
      %329 = vmatmul.f32.gmra.mxu0 %v302
      %v330 = vpop.f32.mrf.mxu0
      %v331 = vadd.f32 %v289, %v330
      %332 = vdwg.mxu0
      %v333 = vxor.u32 %v322, 2147483648
      %v334 = vxor.u32 %v325, 2147483648
      %v335 = vxor.u32 %v328, 2147483648
      %v336 = vxor.u32 %v331, 2147483648
      %v337 = vmul.f32 %v333, 1.442695
      %v338 = vpow.pop %v337
      %v339 = vmul.f32 %v334, 1.442695
      %v340 = vpow.pop %v339
      %v341 = vmul.f32 %v335, 1.442695
      %v342 = vpow.pop %v341
      %v343 = vmul.f32 %v336, 1.442695
      %v344 = vpow.pop %v343
      %v345 = vadd.f32 %v338, 1.0
      %v346 = vadd.f32 %v340, 1.0
      %v347 = vadd.f32 %v342, 1.0
      %v348 = vadd.f32 %v344, 1.0
      %v349 = vrcp.pop %v345
      %v350 = vmul.f32 %v345, %v349
      %v351 = vsub.f32 1.0, %v350
      %v352 = vmul.f32 %v349, %v351
      %v353 = vadd.f32 %v349, %v352
      %vm354 = vweird.f32 %v345
      %vm355 = vweird.f32 %v349
      %vm356 = vmor %vm354, %vm355
      %v357 = vsel %vm356, %v349, %v353
      %v358 = vand.u32 2147483647, %v345
      %vm359 = vcmp.eq.f32.partialorder %v358, 8.507059e+37
      %v360 = vand.u32 %v345, 2147483648
      %v361 = vor.u32 1.1754944e-38, %v360
      %v362 = vsel %vm359, %v361, %v357
      %v363 = vmul.f32 1.0, %v362
      %v364 = vrcp.pop %v346
      %v365 = vmul.f32 %v346, %v364
      %v366 = vsub.f32 1.0, %v365
      %v367 = vmul.f32 %v364, %v366
      %v368 = vadd.f32 %v364, %v367
      %vm369 = vweird.f32 %v346
      %vm370 = vweird.f32 %v364
      %vm371 = vmor %vm369, %vm370
      %v372 = vsel %vm371, %v364, %v368
      %v373 = vand.u32 2147483647, %v346
      %vm374 = vcmp.eq.f32.partialorder %v373, 8.507059e+37
      %v375 = vand.u32 %v346, 2147483648
      %v376 = vor.u32 1.1754944e-38, %v375
      %v377 = vsel %vm374, %v376, %v372
      %v378 = vmul.f32 1.0, %v377
      %v379 = vrcp.pop %v347
      %v380 = vmul.f32 %v347, %v379
      %v381 = vsub.f32 1.0, %v380
      %v382 = vmul.f32 %v379, %v381
      %v383 = vadd.f32 %v379, %v382
      %vm384 = vweird.f32 %v347
      %vm385 = vweird.f32 %v379
      %vm386 = vmor %vm384, %vm385
      %v387 = vsel %vm386, %v379, %v383
      %v388 = vand.u32 2147483647, %v347
      %vm389 = vcmp.eq.f32.partialorder %v388, 8.507059e+37
      %v390 = vand.u32 %v347, 2147483648
      %v391 = vor.u32 1.1754944e-38, %v390
      %v392 = vsel %vm389, %v391, %v387
      %v393 = vmul.f32 1.0, %v392
      %v394 = vrcp.pop %v348
      %v395 = vmul.f32 %v348, %v394
      %v396 = vsub.f32 1.0, %v395
      %v397 = vmul.f32 %v394, %v396
      %v398 = vadd.f32 %v394, %v397
      %vm399 = vweird.f32 %v348
      %vm400 = vweird.f32 %v394
      %vm401 = vmor %vm399, %vm400
      %v402 = vsel %vm401, %v394, %v398
      %v403 = vand.u32 2147483647, %v348
      %vm404 = vcmp.eq.f32.partialorder %v403, 8.507059e+37
      %v405 = vand.u32 %v348, 2147483648
      %v406 = vor.u32 1.1754944e-38, %v405
      %v407 = vsel %vm404, %v406, %v402
      %v408 = vmul.f32 1.0, %v407
      %v409 = vmul.f32 %v322, %v363
      %v410 = vmul.f32 %v325, %v378
      %v411 = vmul.f32 %v328, %v393
      %v412 = vmul.f32 %v331, %v408
      %v413 = vld [vmem:[%s3] sm:$0xff]
      %v414 = vld [vmem:[%s3 + $0x8] sm:$0xff]
      %v415 = vld [vmem:[%s3 + $0x10] sm:$0xff]
      %v416 = vld [vmem:[%s3 + $0x18] sm:$0xff]
      %v417 = vld [vmem:[%s4] sm:$0xff]
      %v418 = vld [vmem:[%s4 + $0x8] sm:$0xff]
      %v419 = vld [vmem:[%s4 + $0x10] sm:$0xff]
      %v420 = vld [vmem:[%s4 + $0x18] sm:$0xff]
      %422 = vset.pattern.permute.xlu0 0
      %423 = vperm.xlu0 %422, %v417
      %v424 = vpop.permute.xlu0 %423
      %427 = vset.pattern.permute.xlu0 0
      %428 = vperm.xlu0 %427, %v418
      %v429 = vpop.permute.xlu0 %428
      %432 = vset.pattern.permute.xlu0 0
      %433 = vperm.xlu0 %432, %v419
      %v434 = vpop.permute.xlu0 %433
      %437 = vset.pattern.permute.xlu0 0
      %438 = vperm.xlu0 %437, %v420
      %v439 = vpop.permute.xlu0 %438
      %v442 = vsel %vm291, %v413, 0
      %v445 = vsel %vm291, %v414, 0
      %v448 = vsel %vm291, %v415, 0
      %v451 = vsel %vm291, %v416, 0
      %453 = vmatpush.msra.mxu0 0.0
      %454 = vmatpush.msra.mxu0 0.0
      %455 = vmatpush.msra.mxu0 0.0
      %456 = vmatpush.msra.mxu0 0.0
      %457 = vmatpush.msra.mxu0 0.0
      %458 = vmatpush.msra.mxu0 0.0
      %459 = vmatpush.msra.mxu0 0.0
      %460 = vmatpush.msra.mxu0 0.0
      %461 = vmatpush.msra.mxu0 0.0
      %462 = vmatpush.msra.mxu0 0.0
      %463 = vmatpush.msra.mxu0 0.0
      %464 = vmatpush.msra.mxu0 0.0
      %465 = vmatpush.msra.mxu0 %v412
      %466 = vmatpush.msra.mxu0 %v411
      %467 = vmatpush.msra.mxu0 %v410
      %468 = vmatpush.msra.mxu0 %v409
      %469 = vmatmul.f32.gmra.mxu0 %v442
      %v470 = vpop.f32.mrf.mxu0
      %v471 = vadd.f32 %v424, %v470
      %472 = vmatmul.f32.gmra.mxu0 %v445
      %v473 = vpop.f32.mrf.mxu0
      %v474 = vadd.f32 %v429, %v473
      %475 = vmatmul.f32.gmra.mxu0 %v448
      %v476 = vpop.f32.mrf.mxu0
      %v477 = vadd.f32 %v434, %v476
      %478 = vmatmul.f32.gmra.mxu0 %v451
      %v479 = vpop.f32.mrf.mxu0
      %v480 = vadd.f32 %v439, %v479
      %481 = vdwg.mxu0
      %vm482 = vcmask 130048
      %483 = vst.msk [vmem:[%s257] sm:$0xff] %vm482, %v471
      %484 = vst.msk [vmem:[%s257 + $0x8] sm:$0xff] %vm482, %v474
      %485 = vst.msk [vmem:[%s257 + $0x10] sm:$0xff] %vm482, %v477
      %486 = vst.msk [vmem:[%s257 + $0x18] sm:$0xff] %vm482, %v480
      %s487 = smul.u32 4, %s20
      %p488 = scmp.lt.s32.totalorder %s487, 7
      %s489 = scalar_select %p488, %s487, 7
      %p490 = scmp.lt.s32.totalorder %s21, 0
      %s491 = scalar_select %p490, %s21, 0
      %s492 = sadd.s32 %s491, %s489
      %s493 = smul.addr %s492, 8
      %s494 = scalar_lea.vmem %s5, %s493
      // Predicated region
      $region41: #{attn_map_forward.1} parent=39 // pred_check
        %p495 = pneg %p160
      $region42: #{attn_map_forward.1} parent=39 // pred_check_branch
        %497 = sbr.rel (%p495) target = $region44
      $region43: #{attn_map_forward.1} parent=39 // pred_region
        %s498 = smul.u32 4, %s20
      $region44: #{attn_map_forward.1} parent=39 // pred_fallthru
        _
    $region40: #{attn_map_forward.1} parent=5 // pred_fallthru
      _
    %p499 = scmp.le.s32.totalorder 2, %s11
    // Predicated region
    $region45: #{attn_map_forward.1} parent=5 // pred_check
      %p500 = pneg %p499
    $region46: #{attn_map_forward.1} parent=5 // pred_check_branch
      %502 = sbr.rel (%p500) target = $region48
    $region47: #{attn_map_forward.1} parent=5 // pred_region
      %s503 = ssub.s32 %s11, 2
      // Predicated region
      $region49: #{attn_map_forward.1} parent=47 // pred_check
        %p504 = pneg %p166
      $region50: #{attn_map_forward.1} parent=47 // pred_check_branch
        %506 = sbr.rel (%p504) target = $region52
      $region51: #{attn_map_forward.1} parent=47 // pred_region
        %s507 = smul.u32 4, %s22
        %p508 = scmp.lt.s32.totalorder %s507, 7
        %s509 = scalar_select %p508, %s507, 7
        %p510 = scmp.lt.s32.totalorder %s23, 0
        %s511 = scalar_select %p510, %s23, 0
        %s512 = sadd.s32 %s511, %s509
        %s513 = smul.addr %s512, 8
        %s514 = scalar_lea.vmem %s5, %s513
      $region52: #{attn_map_forward.1} parent=47 // pred_fallthru
        _
    $region48: #{attn_map_forward.1} parent=5 // pred_fallthru
      _
  $region6: #{attn_map_forward.1} parent=0 // loop_footer
    %s15 = sadd.s32 1, %s11
  $region7: #{attn_map_forward.1} parent=0 // loop_footer_branch
    %10 = sbr.rel target = $region3
  $region8: #{attn_map_forward.1} parent=0 // loop_exit
    _

</llo_original>
